<compile_context>
chip_gen: v5e
topology: v5e:2x2
jax: 0.10.0
libtpu: 0.0.40
codegen_flags: <defaults>
</compile_context>

<pallas_src>
import jax
import jax.numpy as jnp
from jax import lax
from jax.experimental import pallas as pl
from jax.experimental.pallas import tpu as pltpu

LANES = 128
NUM_CORES = 2          # v7x has 2 TensorCores; extra axis is a no-op loop on v5e/v6e
MAX_TILE_ROWS = 4096   # 4096 * 128 * 4B = 2 MiB per f32 block


def _round_up(x, m):
    return ((x + m - 1) // m) * m


def _make_kernel(rows, tile_rows, tiles_per_core, need_mask):
    def kernel(p_ref, a_ref, o_ref):
        c = pl.program_id(0)          # core / parallel axis
        k = pl.program_id(1)          # reduction (arbitrary) axis

        @pl.when(k == 0)
        def _():
            o_ref[...] = jnp.zeros_like(o_ref)

        diff = p_ref[...].astype(jnp.float32) - a_ref[...].astype(jnp.float32)
        ad = jnp.abs(diff)

        if need_mask:
            # Global (unclamped) tile index; rows past `rows` (ragged tail or
            # phantom tiles of the core split) contribute zero.
            t = c * tiles_per_core + k
            valid = rows - t * tile_rows
            row_id = lax.broadcasted_iota(jnp.int32, ad.shape, 0)
            ad = jnp.where(row_id < valid, ad, 0.0)

        # Fold (tile_rows, 128) -> (8, 128) with VPU adds into the resident
        # per-core output block (which acts as the accumulator).  The reshape
        # is sublane-tile aligned, so it is layout-free.
        o_ref[...] += jnp.sum(ad.reshape(tile_rows // 8, 8, LANES), axis=0)

    return kernel


def abs_mse_loss(preds, answer):
    """Pallas implementation of absMSELoss.forward (mean absolute error)."""
    assert preds.shape == answer.shape, "preds/answer must have identical shapes"
    n = preds.size
    assert n > 0

    # Sublane multiple accounting for sub-32-bit packing of either input dtype.
    pack_p = max(1, 4 // jnp.dtype(preds.dtype).itemsize)
    pack_a = max(1, 4 // jnp.dtype(answer.dtype).itemsize)
    sub = 8 * max(pack_p, pack_a)

    p_flat = preds.reshape(-1)
    a_flat = answer.reshape(-1)
    if n % LANES != 0:
        # Fallback for ragged element counts: minimal tail pad only
        # (|0 - 0| = 0, so correctness is unaffected; mean divides by true n).
        n_pad = _round_up(n, LANES)
        p_flat = jnp.pad(p_flat, (0, n_pad - n))
        a_flat = jnp.pad(a_flat, (0, n_pad - n))
    rows = p_flat.size // LANES
    p2 = p_flat.reshape(rows, LANES)
    a2 = a_flat.reshape(rows, LANES)

    tile_rows = min(MAX_TILE_ROWS, _round_up(pl.cdiv(rows, NUM_CORES), sub))
    num_tiles = pl.cdiv(rows, tile_rows)
    tiles_per_core = pl.cdiv(num_tiles, NUM_CORES)
    clamp = (NUM_CORES * tiles_per_core) != num_tiles
    need_mask = (NUM_CORES * tiles_per_core * tile_rows) != rows

    def in_map(c, k):
        t = c * tiles_per_core + k
        if clamp:
            # Phantom tiles (core-split remainder) re-read the last real tile;
            # their contribution is masked to zero inside the kernel.
            t = jnp.minimum(t, num_tiles - 1)
        return (t, 0)

    kernel = _make_kernel(rows, tile_rows, tiles_per_core, need_mask)

    partials = pl.pallas_call(
        kernel,
        out_shape=jax.ShapeDtypeStruct((NUM_CORES * 8, LANES), jnp.float32),
        grid_spec=pltpu.PrefetchScalarGridSpec(
            num_scalar_prefetch=0,
            grid=(NUM_CORES, tiles_per_core),
            in_specs=[
                pl.BlockSpec((tile_rows, LANES), in_map),
                pl.BlockSpec((tile_rows, LANES), in_map),
            ],
            out_specs=pl.BlockSpec((8, LANES), lambda c, k: (c, 0)),
        ),
        compiler_params=pltpu.CompilerParams(
            dimension_semantics=("parallel", "arbitrary")),
    )(p2, a2)

    # Tiny final cross-lane/core reduction + mean over the TRUE element count.
    return jnp.sum(partials) / jnp.float32(n)


if __name__ == "__main__":
    key = jax.random.PRNGKey(0)
    k1, k2 = jax.random.split(key)
    # NCHW-like small shapes consistent with a conv-regression use-case.
    preds = jax.random.normal(k1, (2, 4, 16, 16), dtype=jnp.float32)
    answer = jax.random.normal(k2, (2, 4, 16, 16), dtype=jnp.float32)

    out = abs_mse_loss(preds, answer)
    out = jax.block_until_ready(out)

    # Sanity check vs. plain JAX reference.
    ref = jnp.mean(jnp.abs(preds - answer))
    assert jnp.allclose(out, ref, rtol=1e-5, atol=1e-6), (out, ref)

    print("KERNEL_OK")
</pallas_src>

<mosaic_0001>
module attributes {stable_mosaic.version = 11 : i64} {
  func.func @kernel(%arg0: i32, %arg1: i32, %arg2: memref<8x128xf32, #tpu.memory_space<vmem>>, %arg3: memref<8x128xf32, #tpu.memory_space<vmem>>, %arg4: memref<8x128xf32, #tpu.memory_space<vmem>>) attributes {dimension_semantics = [#tpu.dimension_semantics<parallel>, #tpu.dimension_semantics<arbitrary>], iteration_bounds = array<i64: 2, 1>, scalar_prefetch = 0 : i64, scratch_operands = 0 : i64, tpu.core_type = #tpu.core_type<tc>, window_params = [{transform_indices = @transform_0, window_bounds = array<i64: 8, 128>}, {transform_indices = @transform_1, window_bounds = array<i64: 8, 128>}, {transform_indices = @transform_2, window_bounds = array<i64: 8, 128>}]} {
    %c0_i32 = arith.constant 0 : i32
    %0 = arith.cmpi eq, %arg1, %c0_i32 : i32
    %1 = arith.extui %0 : i1 to i32
    %c0_i32_0 = arith.constant 0 : i32
    %2 = arith.cmpi ne, %1, %c0_i32_0 : i32
    scf.if %2 {
      %cst_8 = arith.constant 0.000000e+00 : f32
      %12 = vector.broadcast %cst_8 : f32 to vector<8x128xf32>
      %c0_9 = arith.constant 0 : index
      %c0_10 = arith.constant 0 : index
      %13 = vector.load %arg4[%c0_9, %c0_10] : memref<8x128xf32, #tpu.memory_space<vmem>>, vector<8x128xf32>
      tpu.vector_store %arg4[%c0_9, %c0_10], %12 {strides = array<i32>} : memref<8x128xf32, #tpu.memory_space<vmem>>, vector<8x128xf32>,
    } else {
    }
    %c0 = arith.constant 0 : index
    %c0_1 = arith.constant 0 : index
    %3 = vector.load %arg2[%c0, %c0_1] : memref<8x128xf32, #tpu.memory_space<vmem>>, vector<8x128xf32>
    %c0_2 = arith.constant 0 : index
    %c0_3 = arith.constant 0 : index
    %4 = vector.load %arg3[%c0_2, %c0_3] : memref<8x128xf32, #tpu.memory_space<vmem>>, vector<8x128xf32>
    %5 = arith.subf %3, %4 : vector<8x128xf32>
    %6 = math.absf %5 : vector<8x128xf32>
    %c0_4 = arith.constant 0 : index
    %c0_5 = arith.constant 0 : index
    %7 = vector.load %arg4[%c0_4, %c0_5] : memref<8x128xf32, #tpu.memory_space<vmem>>, vector<8x128xf32>
    %8 = vector.shape_cast %6 : vector<8x128xf32> to vector<1x8x128xf32>
    %cst = arith.constant dense<0.000000e+00> : vector<8x128xf32>
    %9 = vector.multi_reduction <add>, %8, %cst [0] : vector<1x8x128xf32> to vector<8x128xf32>
    %10 = arith.addf %7, %9 : vector<8x128xf32>
    %c0_6 = arith.constant 0 : index
    %c0_7 = arith.constant 0 : index
    %11 = vector.load %arg4[%c0_6, %c0_7] : memref<8x128xf32, #tpu.memory_space<vmem>>, vector<8x128xf32>
    tpu.vector_store %arg4[%c0_6, %c0_7], %10 {strides = array<i32>} : memref<8x128xf32, #tpu.memory_space<vmem>>, vector<8x128xf32>,
    return
  }
  func.func @transform_0(%arg0: i32, %arg1: i32) -> (i32, i32) {
    %c1_i32 = arith.constant 1 : i32
    %0 = arith.muli %arg0, %c1_i32 : i32
    %1 = arith.addi %0, %arg1 : i32
    %c0_i32 = arith.constant 0 : i32
    %c0_i32_0 = arith.constant 0 : i32
    return %1, %c0_i32 : i32, i32
  }
  func.func @transform_1(%arg0: i32, %arg1: i32) -> (i32, i32) {
    %c1_i32 = arith.constant 1 : i32
    %0 = arith.muli %arg0, %c1_i32 : i32
    %1 = arith.addi %0, %arg1 : i32
    %c0_i32 = arith.constant 0 : i32
    %c0_i32_0 = arith.constant 0 : i32
    return %1, %c0_i32 : i32, i32
  }
  func.func @transform_2(%arg0: i32, %arg1: i32) -> (i32, i32) {
    %c0_i32 = arith.constant 0 : i32
    %c0_i32_0 = arith.constant 0 : i32
    return %arg0, %c0_i32 : i32, i32
  }
}

</mosaic_0001>

<llo_original>
// kernel: tpu_custom_call.1
$region0: #{tpu_custom_call.1}
  #allocation0 [shape = 'u32[]', space=smem, size = 0x4, offset = 0x4, fixed_abs, tag = 'smem constant byte address 0x4 - core index']
  #allocation1 [shape = 'u32[72,128]{1,0:T(1,128)}', space=vmem, size = 0x9000, scoped, tag = 'internal scratch']
  %s0 = inlined_call_operand.hbm [shape: f32[16,128], index: 0, kind: input, shape index: {}]
  %s1 = inlined_call_operand.hbm [shape: f32[16,128], index: 1, kind: input, shape index: {}]
  %s2 = inlined_call_operand.hbm [shape: f32[16,128], index: 2, kind: output, shape index: {}]
  %s3 = sld [smem:[#allocation0]]
  $region53: #{tpu_custom_call.1} parent=0
    _
  %s5 = ssub.s32 1, %s3
  %s6 = scalar_select 0, %s5, %s3
  $region1: #{tpu_custom_call.1} parent=0
    #allocation2 [shape = 'u8[8192]{0}', space=vmem, size = 0x2000, scoped, tag = 'input window, operand 0']
    #allocation3 [shape = 's32[2]{0}', space=sflag, size = 0x8, scoped, tag = 'scoped memory for tpu_custom_call.1']
    #allocation4 [shape = 's32[2]{0}', space=sflag, size = 0x8, scoped, tag = 'scoped memory for tpu_custom_call.1']
    #allocation5 [shape = 'u8[8192]{0}', space=vmem, size = 0x2000, scoped, tag = 'input window, operand 1']
    #allocation6 [shape = 's32[2]{0}', space=sflag, size = 0x8, scoped, tag = 'scoped memory for tpu_custom_call.1']
    #allocation7 [shape = 'u8[8192]{0}', space=vmem, size = 0x2000, scoped, tag = 'output window, operand 0']
    %7 = vsyncpa [#allocation3], 0
    %s8 = scalar_lea.sflag [#allocation3], 1
    %9 = vsyncpa %s8, 0
    %10 = vsyncpa [#allocation6], 0
    %s11 = scalar_lea.sflag [#allocation6], 1
    %12 = vsyncpa %s11, 0
    %13 = vsyncpa [#allocation4], 0
    %s14 = scalar_lea.sflag [#allocation4], 1
    %15 = vsyncpa %s14, 0
    loop: start=0, step=1, limit=4
    $region2: #{tpu_custom_call.1} parent=1 // loop_pre_header
      _
    $region3: #{tpu_custom_call.1} parent=1 // loop_header
      %s17 = sphi 0, %s21
      %p18 = scmp.ge.s32.totalorder %s17, 4
      %s24 = sphi 0, %s36
      %s25 = sphi 0, %s32
      %s26 = sphi 0, %s24
      %s27 = sphi 0, %s25
      %s28 = sphi 0, %s26
      %s29 = sphi 0, %s27
      %s41 = sphi 0, %s43
      %s44 = sphi 0, %s41
      %s45 = sphi 0, %s44
      %s61 = sphi 0, %s45
      %s69 = sphi 0, %s71
      %s72 = sphi 0, %s69
      %s73 = sphi 0, %s72
      %s89 = sphi 0, %s73
      %s95 = sphi 0, %s97
      %s98 = sphi 0, %s95
      %s99 = sphi 0, %s98
      %s115 = sphi 0, %s99
    $region4: #{tpu_custom_call.1} parent=1 // loop_header_branch
      %20 = sbr.rel (%p18) target = $region8
    $region5: #{tpu_custom_call.1} parent=1 // loop_body
      %s22 = ssub.s32 %s17, 1
      %s23 = ssub.s32 %s17, 2
      %s30 = sadd.s32 1, %s25
      %p31 = scmp.ge.s32.totalorder %s30, 1
      %s32 = scalar_select %p31, 0, %s30
      %s33 = sadd.s32 1, %s24
      %s34 = scalar_select %p31, %s33, %s24
      %p35 = scmp.ge.s32.totalorder %s34, 2
      %s36 = scalar_select %p35, 0, %s34
      %s37 = sadd.s32 %s24, %s25
      %s38 = sadd.s32 %s36, %s32
      %s39 = ssub.s32 %s37, %s38
      %p40 = scmp.eq.s32.totalorder %s39, 0
      %s42 = sadd.s32 %s41, 1
      %s43 = scalar_select %p40, %s41, %s42
      %p46 = pneg %p40
      %p47 = scmp.eq.s32.totalorder %s17, 1
      %p48 = por %p46, %p47
      %p49 = scmp.ne.s32.totalorder %s41, %s44
      %p50 = scmp.eq.s32.totalorder %s17, 0
      %p51 = por %p49, %p50
      %p52 = scmp.ne.s32.totalorder %s41, %s44
      %p53 = scmp.eq.s32.totalorder %s22, 1
      %p54 = por %p52, %p53
      %p55 = scmp.ne.s32.totalorder %s44, %s45
      %p56 = scmp.eq.s32.totalorder %s22, 0
      %p57 = por %p55, %p56
      %p58 = scmp.ne.s32.totalorder %s44, %s45
      %p59 = scmp.eq.s32.totalorder %s23, 1
      %p60 = por %p58, %p59
      %p62 = scmp.ne.s32.totalorder %s45, %s61
      %p63 = scmp.eq.s32.totalorder %s23, 0
      %p64 = por %p62, %p63
      %s65 = sadd.s32 %s24, %s25
      %s66 = sadd.s32 %s36, %s32
      %s67 = ssub.s32 %s65, %s66
      %p68 = scmp.eq.s32.totalorder %s67, 0
      %s70 = sadd.s32 %s69, 1
      %s71 = scalar_select %p68, %s69, %s70
      %p74 = pneg %p68
      %p75 = scmp.eq.s32.totalorder %s17, 1
      %p76 = por %p74, %p75
      %p77 = scmp.ne.s32.totalorder %s69, %s72
      %p78 = scmp.eq.s32.totalorder %s17, 0
      %p79 = por %p77, %p78
      %p80 = scmp.ne.s32.totalorder %s69, %s72
      %p81 = scmp.eq.s32.totalorder %s22, 1
      %p82 = por %p80, %p81
      %p83 = scmp.ne.s32.totalorder %s72, %s73
      %p84 = scmp.eq.s32.totalorder %s22, 0
      %p85 = por %p83, %p84
      %p86 = scmp.ne.s32.totalorder %s72, %s73
      %p87 = scmp.eq.s32.totalorder %s23, 1
      %p88 = por %p86, %p87
      %p90 = scmp.ne.s32.totalorder %s73, %s89
      %p91 = scmp.eq.s32.totalorder %s23, 0
      %p92 = por %p90, %p91
      %s93 = ssub.s32 %s24, %s36
      %p94 = scmp.eq.s32.totalorder %s93, 0
      %s96 = sadd.s32 %s95, 1
      %s97 = scalar_select %p94, %s95, %s96
      %p100 = pneg %p94
      %p101 = scmp.eq.s32.totalorder %s17, 1
      %p102 = por %p100, %p101
      %p103 = scmp.ne.s32.totalorder %s95, %s98
      %p104 = scmp.eq.s32.totalorder %s17, 0
      %p105 = por %p103, %p104
      %p106 = scmp.ne.s32.totalorder %s95, %s98
      %p107 = scmp.eq.s32.totalorder %s22, 1
      %p108 = por %p106, %p107
      %p109 = scmp.ne.s32.totalorder %s98, %s99
      %p110 = scmp.eq.s32.totalorder %s22, 0
      %p111 = por %p109, %p110
      %p112 = scmp.ne.s32.totalorder %s98, %s99
      %p113 = scmp.eq.s32.totalorder %s23, 1
      %p114 = por %p112, %p113
      %p116 = scmp.ne.s32.totalorder %s99, %s115
      %p117 = scmp.eq.s32.totalorder %s23, 0
      %p118 = por %p116, %p117
      %p119 = scmp.le.s32.totalorder 1, %s17
      %p120 = scmp.lt.s32.totalorder %s17, 3
      %p121 = pnand %p119, %p120
      %p122 = pneg %p121
      // Predicated region
      $region9: #{tpu_custom_call.1} parent=5 // pred_check
        _
      $region10: #{tpu_custom_call.1} parent=5 // pred_check_branch
        %124 = sbr.rel (%p121) target = $region12
      $region11: #{tpu_custom_call.1} parent=5 // pred_region
        %s125 = ssub.s32 %s17, 1
      $region12: #{tpu_custom_call.1} parent=5 // pred_fallthru
        _
      %p126 = scmp.lt.s32.totalorder %s17, 2
      // Predicated region
      $region13: #{tpu_custom_call.1} parent=5 // pred_check
        %p127 = pneg %p126
      $region14: #{tpu_custom_call.1} parent=5 // pred_check_branch
        %129 = sbr.rel (%p127) target = $region16
      $region15: #{tpu_custom_call.1} parent=5 // pred_region
        // Predicated region
        $region17: #{tpu_custom_call.1} parent=15 // pred_check
          %p130 = pneg %p51
        $region18: #{tpu_custom_call.1} parent=15 // pred_check_branch
          %132 = sbr.rel (%p130) target = $region20
        $region19: #{tpu_custom_call.1} parent=15 // pred_region
          %s133 = sand.u32 %s41, 1
          %s134 = scalar_lea.sflag [#allocation3], %s133
          %s135 = sand.u32 %s41, 1
          %s136 = smul.addr %s135, 8
          %s137 = scalar_lea.vmem [#allocation2], %s136
          %s138 = sadd.s32 %s24, %s25
          %140 = vsyncadd %s134, 0
          %s141 = smul.addr %s138, 8
          %s142 = scalar_lea.hbm %s0, %s141
          %s144 = sshll.u32 %s142, 4
          %s145 = int_to_ptr.hbm [resolvable:$true] %s144
          %s146 = sshll.u32 %s137, 4
          %s147 = int_to_ptr.vmem [resolvable:$true] %s146
          %149 = dma.hbm_to_vmem [thread:$0]  %s145, 128, %s147, %s134
        $region20: #{tpu_custom_call.1} parent=15 // pred_fallthru
          _
        // Predicated region
        $region21: #{tpu_custom_call.1} parent=15 // pred_check
          %p150 = pneg %p79
        $region22: #{tpu_custom_call.1} parent=15 // pred_check_branch
          %152 = sbr.rel (%p150) target = $region24
        $region23: #{tpu_custom_call.1} parent=15 // pred_region
          %s153 = sand.u32 %s69, 1
          %s154 = scalar_lea.sflag [#allocation6], %s153
          %s155 = sand.u32 %s69, 1
          %s156 = smul.addr %s155, 8
          %s157 = scalar_lea.vmem [#allocation5], %s156
          %s158 = sadd.s32 %s24, %s25
          %160 = vsyncadd %s154, 0
          %s161 = smul.addr %s158, 8
          %s162 = scalar_lea.hbm %s1, %s161
          %s164 = sshll.u32 %s162, 4
          %s165 = int_to_ptr.hbm [resolvable:$true] %s164
          %s166 = sshll.u32 %s157, 4
          %s167 = int_to_ptr.vmem [resolvable:$true] %s166
          %169 = dma.hbm_to_vmem [thread:$0]  %s165, 128, %s167, %s154
        $region24: #{tpu_custom_call.1} parent=15 // pred_fallthru
          _
      $region16: #{tpu_custom_call.1} parent=5 // pred_fallthru
        _
      %p170 = scmp.le.s32.totalorder 1, %s17
      %p171 = scmp.lt.s32.totalorder %s17, 3
      %p172 = pnand %p170, %p171
      %p173 = pneg %p172
      // Predicated region
      $region25: #{tpu_custom_call.1} parent=5 // pred_check
        _
      $region26: #{tpu_custom_call.1} parent=5 // pred_check_branch
        %175 = sbr.rel (%p172) target = $region28
      $region27: #{tpu_custom_call.1} parent=5 // pred_region
        %s176 = ssub.s32 %s17, 1
        %s177 = sand.u32 %s44, 1
        %s178 = scalar_lea.sflag [#allocation3], %s177
        %s179 = sand.u32 %s44, 1
        %s180 = smul.addr %s179, 8
        %s181 = scalar_lea.vmem [#allocation2], %s180
        // Predicated region
        $region29: #{tpu_custom_call.1} parent=27 // pred_check
          %p182 = pneg %p57
        $region30: #{tpu_custom_call.1} parent=27 // pred_check_branch
          %184 = sbr.rel (%p182) target = $region32
        $region31: #{tpu_custom_call.1} parent=27 // pred_region
          %186 = dma.done %s178, 128
        $region32: #{tpu_custom_call.1} parent=27 // pred_fallthru
          _
        %s187 = sand.u32 %s72, 1
        %s188 = scalar_lea.sflag [#allocation6], %s187
        %s189 = sand.u32 %s72, 1
        %s190 = smul.addr %s189, 8
        %s191 = scalar_lea.vmem [#allocation5], %s190
        // Predicated region
        $region33: #{tpu_custom_call.1} parent=27 // pred_check
          %p192 = pneg %p85
        $region34: #{tpu_custom_call.1} parent=27 // pred_check_branch
          %194 = sbr.rel (%p192) target = $region36
        $region35: #{tpu_custom_call.1} parent=27 // pred_region
          %196 = dma.done %s188, 128
        $region36: #{tpu_custom_call.1} parent=27 // pred_fallthru
          _
        %s197 = sand.u32 %s44, 1
        %s198 = scalar_lea.sflag [#allocation3], %s197
        %s199 = sand.u32 %s44, 1
        %s200 = smul.addr %s199, 8
        %s201 = scalar_lea.vmem [#allocation2], %s200
        %p202 = pneg %p57
        %p203 = pneg %p54
        %s204 = sand.u32 %s72, 1
        %s205 = scalar_lea.sflag [#allocation6], %s204
        %s206 = sand.u32 %s72, 1
        %s207 = smul.addr %s206, 8
        %s208 = scalar_lea.vmem [#allocation5], %s207
        %p209 = pneg %p85
        %p210 = pneg %p82
        %p211 = pneg %p111
        %p212 = pneg %p108
        %s213 = sand.u32 %s98, 1
        %s214 = scalar_lea.sflag [#allocation4], %s213
        %s215 = sand.u32 %s98, 1
        %s216 = smul.addr %s215, 8
        %s217 = scalar_lea.vmem [#allocation7], %s216
        %s218 = sadd.s32 %s26, %s27
        %s219 = sadd.s32 %s26, %s27
        %p220 = scmp.eq.s32.totalorder %s27, 0
        // Predicated region
        $region37: #{tpu_custom_call.1} parent=27 // pred_check
          %p221 = pneg %p220
        $region38: #{tpu_custom_call.1} parent=27 // pred_check_branch
          %223 = sbr.rel (%p221) target = $region40
        $region39: #{tpu_custom_call.1} parent=27 // pred_region
          %224 = vst [vmem:[%s217] sm:$0xff] 0.0
        $region40: #{tpu_custom_call.1} parent=27 // pred_fallthru
          _
        %v225 = vld [vmem:[%s181] sm:$0xff]
        %v226 = vld [vmem:[%s191] sm:$0xff]
        %v227 = vsub.f32 %v225, %v226
        %v228 = vand.u32 2147483647, %v227
        %v229 = vld [vmem:[%s217] sm:$0xff]
        %v230 = vadd.f32 %v228, 0.0
        %v231 = vadd.f32 %v229, %v230
        %232 = vst [vmem:[%s217] sm:$0xff] %v231
        %s233 = sand.u32 %s98, 1
        %s234 = scalar_lea.sflag [#allocation4], %s233
        %s235 = sand.u32 %s98, 1
        %s236 = smul.addr %s235, 8
        %s237 = scalar_lea.vmem [#allocation7], %s236
        // Predicated region
        $region41: #{tpu_custom_call.1} parent=27 // pred_check
          %p238 = pneg %p108
        $region42: #{tpu_custom_call.1} parent=27 // pred_check_branch
          %240 = sbr.rel (%p238) target = $region44
        $region43: #{tpu_custom_call.1} parent=27 // pred_region
          %242 = vsyncadd %s234, 0
          %s243 = smul.addr %s26, 8
          %s244 = scalar_lea.hbm %s2, %s243
          %s246 = sshll.u32 %s237, 4
          %s247 = int_to_ptr.vmem [resolvable:$true] %s246
          %s248 = sshll.u32 %s244, 4
          %s249 = int_to_ptr.hbm [resolvable:$true] %s248
          %251 = dma.vmem_to_hbm [thread:$0]  %s247, 128, %s249, %s234
        $region44: #{tpu_custom_call.1} parent=27 // pred_fallthru
          _
      $region28: #{tpu_custom_call.1} parent=5 // pred_fallthru
        _
      %p252 = scmp.le.s32.totalorder 2, %s17
      // Predicated region
      $region45: #{tpu_custom_call.1} parent=5 // pred_check
        %p253 = pneg %p252
      $region46: #{tpu_custom_call.1} parent=5 // pred_check_branch
        %255 = sbr.rel (%p253) target = $region48
      $region47: #{tpu_custom_call.1} parent=5 // pred_region
        %s256 = ssub.s32 %s17, 2
        // Predicated region
        $region49: #{tpu_custom_call.1} parent=47 // pred_check
          %p257 = pneg %p114
        $region50: #{tpu_custom_call.1} parent=47 // pred_check_branch
          %259 = sbr.rel (%p257) target = $region52
        $region51: #{tpu_custom_call.1} parent=47 // pred_region
          %s260 = sand.u32 %s99, 1
          %s261 = scalar_lea.sflag [#allocation4], %s260
          %s262 = sand.u32 %s99, 1
          %s263 = smul.addr %s262, 8
          %s264 = scalar_lea.vmem [#allocation7], %s263
          %266 = dma.done %s261, 128
        $region52: #{tpu_custom_call.1} parent=47 // pred_fallthru
          _
      $region48: #{tpu_custom_call.1} parent=5 // pred_fallthru
        _
    $region6: #{tpu_custom_call.1} parent=1 // loop_footer
      %s21 = sadd.s32 1, %s17
    $region7: #{tpu_custom_call.1} parent=1 // loop_footer_branch
      %16 = sbr.rel target = $region3
    $region8: #{tpu_custom_call.1} parent=1 // loop_exit
      _
    %267 = vsyncpa [#allocation3], 1
    %s268 = scalar_lea.sflag [#allocation3], 1
    %269 = vsyncpa %s268, 1
    %270 = vsyncpa [#allocation6], 1
    %s271 = scalar_lea.sflag [#allocation6], 1
    %272 = vsyncpa %s271, 1
    %273 = vsyncpa [#allocation4], 1
    %s274 = scalar_lea.sflag [#allocation4], 1
    %275 = vsyncpa %s274, 1

</llo_original>
